<compile_context>
chip_gen: v7x
topology: tpu7x:2x2x1
jax: 0.10.0
libtpu: 0.0.40
codegen_flags: <defaults>
</compile_context>

<pallas_src>
import jax
import jax.numpy as jnp
from jax.experimental import pallas as pl
from jax.experimental.pallas import tpu as pltpu


def _bn_kernel(x_ref, p_ref, o_ref):
    # x_ref: (TR, HW)  input tile (possibly low precision, e.g. bf16)
    # p_ref: (TR, 2)   fp32 per-row params: [:, 0] = scale, [:, 1] = bias
    # o_ref: (TR, HW)  output tile, same dtype as input
    x = x_ref[...].astype(jnp.float32)            # emulate x.float()
    scale = p_ref[:, 0:1]                         # (TR, 1) broadcast over lanes
    bias = p_ref[:, 1:2]                          # (TR, 1)
    o_ref[...] = (x * scale + bias).astype(o_ref.dtype)   # emulate .to(input_type)


def _vmem_capacity_bytes():
    try:
        return int(pltpu.get_tpu_info().vmem_capacity_bytes)
    except Exception:
        return 64 * 1024 * 1024   # conservative (v7x per-TC VMEM)


def batchnorm_wrapper_forward(x, gamma, beta, running_mean, running_var,
                              eps=1e-5, block_rows=None):
    """x: (N, C, H, W), any float dtype. Params: (C,) float32. Returns x.dtype."""
    N, C, H, W = x.shape
    HW = H * W
    NC = N * C
    in_dtype = x.dtype
    dtype_bytes = jnp.dtype(in_dtype).itemsize

    # Fold running stats into a per-channel fp32 affine (tiny XLA prologue), then
    # tile to per-row (N*C, 2). HBM cost: N*C*8 bytes -- negligible.
    scale_c = (gamma.astype(jnp.float32)
               * jax.lax.rsqrt(running_var.astype(jnp.float32) + eps))
    bias_c = beta.astype(jnp.float32) - running_mean.astype(jnp.float32) * scale_c
    params = jnp.stack([scale_c, bias_c], axis=-1)                 # (C, 2)
    params = jnp.broadcast_to(params[None], (N, C, 2)).reshape(NC, 2)

    # Flat row view: no jnp.pad, no output slice. The block's last dim is the
    # full HW extent, so Mosaic handles the lane tail with masked stores.
    x2 = x.reshape(NC, HW)

    # --- Generation-aware tile sizing -------------------------------------
    vmem_cap = _vmem_capacity_bytes()
    footprint_budget = vmem_cap // 2          # in+out, double buffered
    tile_target = footprint_budget // 4       # bytes per input tile

    sublane = max(8, 32 // dtype_bytes)       # 8 rows for f32, 16 for bf16
    HWp = ((HW + 127) // 128) * 128           # VMEM lane-padded row width (footprint only)
    row_bytes = HWp * dtype_bytes

    if block_rows is not None:
        TR = block_rows
    else:
        TR = max(sublane, (tile_target // row_bytes) // sublane * sublane)
        TR = min(TR, ((NC + sublane - 1) // sublane) * sublane)
        # v7x megacore: expose >=2 parallel blocks when there are enough rows.
        if TR >= NC and NC >= 2 * sublane:
            TR = ((NC + 1) // 2 + sublane - 1) // sublane * sublane
        if TR >= NC:
            TR = NC                           # single full-extent block (exempt from 8-rule)

    # Robustness: a partial block shape must still satisfy the sublane rule.
    assert TR == NC or TR % 8 == 0, (
        f"block_rows={TR} must be a multiple of 8 or equal to N*C={NC}")

    grid = (pl.cdiv(NC, TR),)

    cost = pl.CostEstimate(
        flops=2 * NC * HW,
        transcendentals=0,
        bytes_accessed=2 * NC * HW * dtype_bytes + NC * 8,
    )

    vmem_limit = min(max(vmem_cap - (8 << 20), 16 << 20),
                     footprint_budget + (8 << 20))

    out2 = pl.pallas_call(
        _bn_kernel,
        out_shape=jax.ShapeDtypeStruct((NC, HW), in_dtype),
        grid_spec=pltpu.PrefetchScalarGridSpec(
            num_scalar_prefetch=0,
            grid=grid,
            in_specs=[
                pl.BlockSpec((TR, HW), lambda i: (i, 0)),
                pl.BlockSpec((TR, 2), lambda i: (i, 0)),
            ],
            out_specs=pl.BlockSpec((TR, HW), lambda i: (i, 0)),
        ),
        compiler_params=pltpu.CompilerParams(
            dimension_semantics=("parallel",),
            vmem_limit_bytes=vmem_limit,
        ),
        cost_estimate=cost,
    )(x2, params)

    return out2.reshape(N, C, H, W)


def _reference(x, gamma, beta, mean, var, eps=1e-5):
    scale = gamma * jax.lax.rsqrt(var + eps)
    bias = beta - mean * scale
    y = (x.astype(jnp.float32) * scale[None, :, None, None]
         + bias[None, :, None, None])
    return y.astype(x.dtype)


def _make_params(key, C):
    kg, kb, km, kv = jax.random.split(key, 4)
    gamma = jax.random.normal(kg, (C,), dtype=jnp.float32) * 0.1 + 1.0
    beta = jax.random.normal(kb, (C,), dtype=jnp.float32) * 0.1
    mean = jax.random.normal(km, (C,), dtype=jnp.float32) * 0.5
    var = jax.random.uniform(kv, (C,), dtype=jnp.float32, minval=0.5, maxval=1.5)
    return gamma, beta, mean, var


if __name__ == "__main__":
    key = jax.random.PRNGKey(0)
    k1, k2, k3, kp1, kp2, kp3 = jax.random.split(key, 6)

    # Test 1: main case -- bf16 input (exercises .float() / .to(dtype) path),
    # HW = 256 (lane-dense), N*C = 8 -> single full-extent row block.
    N, C, H, W = 2, 4, 16, 16
    x = jax.random.normal(k1, (N, C, H, W), dtype=jnp.float32).astype(jnp.bfloat16)
    gamma, beta, mean, var = _make_params(kp1, C)
    y = jax.block_until_ready(batchnorm_wrapper_forward(x, gamma, beta, mean, var))
    ref = _reference(x, gamma, beta, mean, var)
    assert y.dtype == x.dtype
    assert jnp.allclose(y.astype(jnp.float32), ref.astype(jnp.float32),
                        atol=1e-2, rtol=1e-2)

    # Test 2: non-multiple-of-128 spatial dim (14x14 -> HW=196, masked lane tail,
    # no host-side pad/slice), f32 input.
    N, C, H, W = 2, 6, 14, 14
    x = jax.random.normal(k2, (N, C, H, W), dtype=jnp.float32)
    gamma, beta, mean, var = _make_params(kp2, C)
    y = jax.block_until_ready(batchnorm_wrapper_forward(x, gamma, beta, mean, var))
    ref = _reference(x, gamma, beta, mean, var)
    assert jnp.allclose(y, ref, atol=1e-5, rtol=1e-5)

    # Test 3a: multiple row blocks via explicit block_rows (tiled grid + per-block
    # param indexing), f32 input.
    N, C, H, W = 2, 32, 16, 16
    x = jax.random.normal(k3, (N, C, H, W), dtype=jnp.float32)
    gamma, beta, mean, var = _make_params(kp3, C)
    y = jax.block_until_ready(
        batchnorm_wrapper_forward(x, gamma, beta, mean, var, block_rows=16))
    ref = _reference(x, gamma, beta, mean, var)
    assert jnp.allclose(y, ref, atol=1e-5, rtol=1e-5)

    # Test 3b: same shape with automatic sizing (exercises the >=2-block split
    # for megacore: N*C=64 -> two 32-row blocks).
    y = jax.block_until_ready(batchnorm_wrapper_forward(x, gamma, beta, mean, var))
    assert jnp.allclose(y, ref, atol=1e-5, rtol=1e-5)

    print("KERNEL_OK")
</pallas_src>

<mosaic_0001>
module attributes {stable_mosaic.version = 11 : i64} {
  func.func @_bn_kernel(%arg0: i32, %arg1: memref<8x256xbf16, #tpu.memory_space<vmem>>, %arg2: memref<8x2xf32, #tpu.memory_space<vmem>>, %arg3: memref<8x256xbf16, #tpu.memory_space<vmem>>) attributes {dimension_semantics = [#tpu.dimension_semantics<parallel>], iteration_bounds = array<i64: 1>, scalar_prefetch = 0 : i64, scratch_operands = 0 : i64, tpu.core_type = #tpu.core_type<tc>, window_params = [{transform_indices = @transform_0, window_bounds = array<i64: 8, 256>}, {transform_indices = @transform_1, window_bounds = array<i64: 8, 2>}, {transform_indices = @transform_2, window_bounds = array<i64: 8, 256>}]} {
    %c0 = arith.constant 0 : index
    %c0_0 = arith.constant 0 : index
    %0 = vector.load %arg1[%c0, %c0_0] : memref<8x256xbf16, #tpu.memory_space<vmem>>, vector<8x256xbf16>
    %1 = arith.extf %0 : vector<8x256xbf16> to vector<8x256xf32>
    %c0_1 = arith.constant 0 : index
    %c0_2 = arith.constant 0 : index
    %2 = vector.load %arg2[%c0_1, %c0_2] : memref<8x2xf32, #tpu.memory_space<vmem>>, vector<8x1xf32>
    %c0_3 = arith.constant 0 : index
    %c1 = arith.constant 1 : index
    %3 = vector.load %arg2[%c0_3, %c1] : memref<8x2xf32, #tpu.memory_space<vmem>>, vector<8x1xf32>
    %4 = vector.broadcast %2 : vector<8x1xf32> to vector<8x256xf32>
    %5 = arith.mulf %1, %4 : vector<8x256xf32>
    %6 = vector.broadcast %3 : vector<8x1xf32> to vector<8x256xf32>
    %7 = arith.addf %5, %6 : vector<8x256xf32>
    %8 = arith.truncf %7 : vector<8x256xf32> to vector<8x256xbf16>
    %c0_4 = arith.constant 0 : index
    %c0_5 = arith.constant 0 : index
    %9 = vector.load %arg3[%c0_4, %c0_5] : memref<8x256xbf16, #tpu.memory_space<vmem>>, vector<8x256xbf16>
    tpu.vector_store %arg3[%c0_4, %c0_5], %8 {strides = array<i32>} : memref<8x256xbf16, #tpu.memory_space<vmem>>, vector<8x256xbf16>,
    return
  }
  func.func @transform_0(%arg0: i32) -> (i32, i32) {
    %c0_i32 = arith.constant 0 : i32
    %c0_i32_0 = arith.constant 0 : i32
    return %arg0, %c0_i32 : i32, i32
  }
  func.func @transform_1(%arg0: i32) -> (i32, i32) {
    %c0_i32 = arith.constant 0 : i32
    %c0_i32_0 = arith.constant 0 : i32
    return %arg0, %c0_i32 : i32, i32
  }
  func.func @transform_2(%arg0: i32) -> (i32, i32) {
    %c0_i32 = arith.constant 0 : i32
    %c0_i32_0 = arith.constant 0 : i32
    return %arg0, %c0_i32 : i32, i32
  }
}

</mosaic_0001>

<llo_original>
// kernel: tpu_custom_call.1
$region0: #{tpu_custom_call.1}
  #allocation0 [shape = 'u32[]', space=smem, size = 0x4, offset = 0x4, fixed_abs, tag = 'smem constant byte address 0x4 - core index']
  #allocation1 [shape = 'u32[144,128]{1,0:T(1,128)}', space=vmem, size = 0x12000, scoped, tag = 'internal scratch']
  %s0 = inlined_call_operand.vmem [shape: bf16[8,256], index: 0, kind: input, shape index: {}]
  %s1 = inlined_call_operand.vmem [shape: f32[8,2], index: 1, kind: input, shape index: {}]
  %s2 = inlined_call_operand.hbm [shape: bf16[8,256], index: 2, kind: output, shape index: {}]
  %s3 = sld [smem:[#allocation0]]
  $region18: #{tpu_custom_call.1} parent=0
    _
  %s5 = ssub.s32 1, %s3
  %s6 = scalar_select 0, %s5, %s3
  $region1: #{tpu_custom_call.1} parent=0
    #allocation2 [shape = 'u8[4096]{0}', space=vmem, size = 0x1000, scoped, tag = 'output window, operand 0, single buffered']
    #allocation3 [shape = 's32[1]{0}', space=sflag, size = 0x4, scoped, tag = 'scoped memory for tpu_custom_call.1']
    %7 = vsyncpa [#allocation3], 0
    // Predicated region
    $region2: #{tpu_custom_call.1} parent=1 // pred_check
      _
    $region3: #{tpu_custom_call.1} parent=1 // pred_check_branch
      %9 = sbr.rel (0) target = $region5
    $region4: #{tpu_custom_call.1} parent=1 // pred_region
      _
    $region5: #{tpu_custom_call.1} parent=1 // pred_fallthru
      _
    // Predicated region
    $region6: #{tpu_custom_call.1} parent=1 // pred_check
      _
    $region7: #{tpu_custom_call.1} parent=1 // pred_check_branch
      %11 = sbr.rel (0) target = $region9
    $region8: #{tpu_custom_call.1} parent=1 // pred_region
      _
    $region9: #{tpu_custom_call.1} parent=1 // pred_fallthru
      _
    %v12 = vld [vmem:[%s0] sm:$0xff]
    %v13 = vunpack.c.l.bf16 %v12
    %v14 = vunpack.c.h.bf16 %v12
    %v15 = vld [vmem:[%s1] sm:$0xff]
    %17 = vset.pattern.permute.xlu0 0
    %18 = vperm.xlu0 %17, %v15
    %v19 = vpop.permute.xlu0 %18
    %v21 = vmul.f32 %v13, %v19
    %v22 = vmul.f32 %v14, %v19
    %23 = vset.pattern.permute.xlu0 1
    %24 = vperm.xlu0 %23, %v15
    %v25 = vpop.permute.xlu0 %24
    %v27 = vadd.f32 %v21, %v25
    %v28 = vadd.f32 %v22, %v25
    %v29 = vpack.c.bf16 %v27, %v27
    %v30 = vpack.c.bf16 %v28, %v28
    %v33 = vunpack.c.l.b16 %v29
    %v34 = vunpack.c.l.b16 %v30
    %v35 = vpack.c.b16 %v34, %v33
    %37 = vst [vmem:[#allocation2] sm:$0xff] %v35
    // Predicated region
    $region10: #{tpu_custom_call.1} parent=1 // pred_check
      _
    $region11: #{tpu_custom_call.1} parent=1 // pred_check_branch
      %39 = sbr.rel (0) target = $region13
    $region12: #{tpu_custom_call.1} parent=1 // pred_region
      %s41 = ssub.s32 128, 128
      %42 = vsyncadd [#allocation3], %s41
      %s44 = sshll.u32 [#allocation2], 4
      %s45 = int_to_ptr.vmem [resolvable:$true] %s44
      %47 = dma.vmem_to_hbm [thread:$0]  %s45, 128, %s2, [#allocation3]
    $region13: #{tpu_custom_call.1} parent=1 // pred_fallthru
      _
    // Predicated region
    $region14: #{tpu_custom_call.1} parent=1 // pred_check
      _
    $region15: #{tpu_custom_call.1} parent=1 // pred_check_branch
      %49 = sbr.rel (0) target = $region17
    $region16: #{tpu_custom_call.1} parent=1 // pred_region
      %50 = dma.done [#allocation3], 128
    $region17: #{tpu_custom_call.1} parent=1 // pred_fallthru
      _
    %51 = vsyncpa [#allocation3], 1

</llo_original>
